<compile_context>
chip_gen: v7x
topology: tpu7x:2x2x1
jax: 0.10.0
libtpu: 0.0.40
codegen_flags: <defaults>
</compile_context>

<pallas_src>
import jax
import jax.numpy as jnp
from jax import lax
from jax.experimental import pallas as pl
from jax.experimental.pallas import tpu as pltpu

NUM_CLASSES = 6
OUT_LANES = 128   # lane-dense output slab; first NUM_CLASSES lanes are real


def _lstm_mlp_logsoftmax_kernel(x_ref, wih_ref, whh_ref, b_ref,
                                w1_ref, b1_ref, w2_ref, b2_ref, out_ref):
    """One batch-tile of the full forward pass.

    x_ref  : (T, TB, E)        bf16  time-major input tile
    wih_ref: (E, 4H)           bf16  input->gates weights (i,f,g,o); i/f/o
                                     columns pre-scaled by 0.5 (sigmoid-as-tanh)
    whh_ref: (H, 4H)           bf16  hidden->gates weights, same pre-scaling
    b_ref  : (1, 4H)           f32   bias_ih + bias_hh, same pre-scaling
    w1_ref : (H, L) bf16, b1_ref: (1, L) f32
    w2_ref : (L, OUT_LANES) bf16 (cols >=6 are zero)
    b2_ref : (1, OUT_LANES) f32  (cols >=6 are -1e30)
    out_ref: (TB, OUT_LANES)   f32   log-probabilities in lanes [0:6)
    """
    T, TB, E = x_ref.shape
    H = whh_ref.shape[0]

    wih = wih_ref[...]          # bf16, resident
    whh = whh_ref[...]          # bf16, resident

    # ---- Input projection hoisted out of the recurrence: one big MXU matmul.
    # (T*TB, E) @ (E, 4H) -> f32, bias folded in once.  Time-major, so zx[t]
    # is contiguous.
    x2 = x_ref[...].reshape(T * TB, E)                      # bf16, no copy
    zx = (jnp.dot(x2, wih, preferred_element_type=jnp.float32)
          + b_ref[...])                                     # (T*TB, 4H) f32
    zx = zx.reshape(T, TB, 4 * H)

    def step(h, c, zt):
        # zt: (TB, 4H) f32 with i/f/o lanes already holding 0.5*z.
        z = zt + jnp.dot(h.astype(jnp.bfloat16), whh,
                         preferred_element_type=jnp.float32)   # (TB, 4H)
        t_all = jnp.tanh(z)           # single lane-dense EUP pass per step
        i = 0.5 * (t_all[:, 0:H] + 1.0)        # == sigmoid(z_i)
        f = 0.5 * (t_all[:, H:2 * H] + 1.0)    # == sigmoid(z_f)
        g = t_all[:, 2 * H:3 * H]              # == tanh(z_g)
        o = 0.5 * (t_all[:, 3 * H:4 * H] + 1.0)
        c = f * c + i * g
        h = o * jnp.tanh(c)
        return h, c

    h = jnp.zeros((TB, H), jnp.float32)
    c = jnp.zeros((TB, H), jnp.float32)
    if T <= 16:
        # Small static T: full unroll keeps only h@W_hh + gate math serial.
        for t in range(T):
            h, c = step(h, c, zx[t])
    else:
        # Long sequences: bound vreg live ranges / code size.
        def body(t, carry):
            hh, cc = carry
            zt = lax.dynamic_index_in_dim(zx, t, axis=0, keepdims=False)
            return step(hh, cc, zt)
        h, c = lax.fori_loop(0, T, body, (h, c))

    # ---- ann: Linear -> ReLU -> Linear (bf16 matmuls, f32 accumulate).
    y1 = jnp.maximum(
        jnp.dot(h.astype(jnp.bfloat16), w1_ref[...],
                preferred_element_type=jnp.float32) + b1_ref[...],
        0.0)
    # Lane-dense head: cols >= 6 get logits ~ -1e30 from the bias, so they
    # vanish under the log-softmax and the whole store is 128-lane dense.
    logits = (jnp.dot(y1.astype(jnp.bfloat16), w2_ref[...],
                      preferred_element_type=jnp.float32)
              + b2_ref[...])                               # (TB, OUT_LANES)

    # ---- LogSoftmax(dim=1) over the real classes (padded lanes contribute 0)
    m = jnp.max(logits, axis=-1, keepdims=True)
    shifted = logits - m
    lse = jnp.log(jnp.sum(jnp.exp(shifted), axis=-1, keepdims=True))
    out_ref[...] = shifted - lse


def mood_classifier_forward(x, params, *, max_block_b=256):
    """x: (B, T, E) float32 -> (B, 6) float32 log-probs.

    max_block_b: 256 fills the 256-wide MXU M dim on v6e/v7x; use 128 on v5e.
    """
    B, T, E = x.shape
    H = params["w_hh"].shape[0]
    L = params["w1"].shape[1]

    # Batch tile: multiple of 8 sublanes, capped by max_block_b.
    tb = min(max_block_b, max(8, ((B + 7) // 8) * 8))
    pad_b = pl.cdiv(B, tb) * tb

    # Time-major, bf16 streamed input (halves DMA bytes; matmul is bf16 anyway).
    x_tm = jnp.transpose(x, (1, 0, 2)).astype(jnp.bfloat16)   # (T, B, E)
    if pad_b != B:
        x_tm = jnp.pad(x_tm, ((0, 0), (0, pad_b - B), (0, 0)))
    grid = (pad_b // tb,)

    # sigmoid(z) = 0.5*(tanh(0.5*z)+1): fold the 0.5 into the i/f/o gate
    # columns of the (tiny) LSTM weights/bias once, so the kernel does a
    # single lane-dense tanh per step with no extra per-step scaling.
    gate_scale = jnp.concatenate(
        [jnp.full((2 * H,), 0.5, jnp.float32),       # i, f
         jnp.ones((H,), jnp.float32),                # g (true tanh gate)
         jnp.full((H,), 0.5, jnp.float32)])          # o
    wih = (params["w_ih"] * gate_scale[None, :]).astype(jnp.bfloat16)
    whh = (params["w_hh"] * gate_scale[None, :]).astype(jnp.bfloat16)
    b_g = (params["b_gates"] * gate_scale[None, :]).astype(jnp.float32)

    w1 = params["w1"].astype(jnp.bfloat16)
    b1 = params["b1"].astype(jnp.float32)

    # Lane-dense classifier head: pad W2 with zero columns and b2 with -1e30
    # so lanes [6:128) never affect the log-softmax.
    w2 = (jnp.zeros((L, OUT_LANES), jnp.float32)
          .at[:, :NUM_CLASSES].set(params["w2"]).astype(jnp.bfloat16))
    b2 = (jnp.full((1, OUT_LANES), -1e30, jnp.float32)
          .at[:, :NUM_CLASSES].set(params["b2"]))

    out = pl.pallas_call(
        _lstm_mlp_logsoftmax_kernel,
        out_shape=jax.ShapeDtypeStruct((pad_b, OUT_LANES), jnp.float32),
        grid=grid,
        in_specs=[
            pl.BlockSpec((T, tb, E), lambda i: (0, i, 0)),     # x: batch-tiled
            pl.BlockSpec((E, 4 * H), lambda i: (0, 0)),        # weights resident
            pl.BlockSpec((H, 4 * H), lambda i: (0, 0)),
            pl.BlockSpec((1, 4 * H), lambda i: (0, 0)),
            pl.BlockSpec((H, L), lambda i: (0, 0)),
            pl.BlockSpec((1, L), lambda i: (0, 0)),
            pl.BlockSpec((L, OUT_LANES), lambda i: (0, 0)),
            pl.BlockSpec((1, OUT_LANES), lambda i: (0, 0)),
        ],
        out_specs=pl.BlockSpec((tb, OUT_LANES), lambda i: (i, 0)),
        compiler_params=pltpu.CompilerParams(
            dimension_semantics=("parallel",)),
    )(x_tm, wih, whh, b_g, w1, b1, w2, b2)
    return out[:B, :NUM_CLASSES]


def init_params(key, dim_embed, n_units_lstm, n_units_linear):
    """Deterministic synthetic init (uniform ~ PyTorch default scale)."""
    H, E, L = n_units_lstm, dim_embed, n_units_linear
    k_lstm = 1.0 / jnp.sqrt(H)
    keys = jax.random.split(key, 8)

    def u(k, shape, scale):
        return jax.random.uniform(k, shape, jnp.float32, -scale, scale)

    params = {
        # stored transposed relative to PyTorch (for x @ W), gate order i,f,g,o
        "w_ih": u(keys[0], (E, 4 * H), k_lstm),
        "w_hh": u(keys[1], (H, 4 * H), k_lstm),
        "b_gates": u(keys[2], (1, 4 * H), k_lstm) + u(keys[3], (1, 4 * H), k_lstm),
        "w1": u(keys[4], (H, L), 1.0 / jnp.sqrt(H)),
        "b1": u(keys[5], (1, L), 1.0 / jnp.sqrt(H)),
        "w2": u(keys[6], (L, 6), 1.0 / jnp.sqrt(L)),
        "b2": u(keys[7], (1, 6), 1.0 / jnp.sqrt(L)),
    }
    return params


def _ref_forward(x, params):
    """Pure-JAX f32 reference mirroring the PyTorch module."""
    H = params["w_hh"].shape[0]
    B = x.shape[0]

    def step(carry, xt):
        h, c = carry
        z = xt @ params["w_ih"] + h @ params["w_hh"] + params["b_gates"]
        i = jax.nn.sigmoid(z[:, 0:H])
        f = jax.nn.sigmoid(z[:, H:2 * H])
        g = jnp.tanh(z[:, 2 * H:3 * H])
        o = jax.nn.sigmoid(z[:, 3 * H:4 * H])
        c = f * c + i * g
        h = o * jnp.tanh(c)
        return (h, c), None

    h0 = jnp.zeros((B, H), jnp.float32)
    c0 = jnp.zeros((B, H), jnp.float32)
    (h, _), _ = lax.scan(step, (h0, c0), jnp.transpose(x, (1, 0, 2)))
    y1 = jnp.maximum(h @ params["w1"] + params["b1"], 0.0)
    logits = y1 @ params["w2"] + params["b2"]
    return jax.nn.log_softmax(logits, axis=1)


if __name__ == "__main__":
    # Small shapes consistent with the module's forward.
    B, T = 4, 8
    dim_embed, n_units_lstm, n_units_linear = 32, 32, 32

    key = jax.random.PRNGKey(0)
    kx, kp = jax.random.split(key)
    x = jax.random.normal(kx, (B, T, dim_embed), jnp.float32)
    params = init_params(kp, dim_embed, n_units_lstm, n_units_linear)

    out = mood_classifier_forward(x, params)
    out = jax.block_until_ready(out)

    ref = _ref_forward(x, params)
    assert out.shape == (B, 6)
    # bf16 matmuls / bf16 x vs f32 reference -> loose tolerance.
    assert jnp.allclose(out, ref, atol=5e-2, rtol=5e-2)
    # log-softmax rows must sum to 1 in prob space
    assert jnp.allclose(jnp.sum(jnp.exp(out), axis=1), 1.0, atol=1e-3)

    print("KERNEL_OK")
</pallas_src>

<mosaic_0001>
module attributes {stable_mosaic.version = 11 : i64} {
  func.func @_lstm_mlp_logsoftmax_kernel(%arg0: i32, %arg1: memref<8x8x32xbf16, #tpu.memory_space<vmem>>, %arg2: memref<32x128xbf16, #tpu.memory_space<vmem>>, %arg3: memref<32x128xbf16, #tpu.memory_space<vmem>>, %arg4: memref<1x128xf32, #tpu.memory_space<vmem>>, %arg5: memref<32x32xbf16, #tpu.memory_space<vmem>>, %arg6: memref<1x32xf32, #tpu.memory_space<vmem>>, %arg7: memref<32x128xbf16, #tpu.memory_space<vmem>>, %arg8: memref<1x128xf32, #tpu.memory_space<vmem>>, %arg9: memref<8x128xf32, #tpu.memory_space<vmem>>) attributes {dimension_semantics = [#tpu.dimension_semantics<parallel>], iteration_bounds = array<i64: 1>, scalar_prefetch = 0 : i64, scratch_operands = 0 : i64, tpu.core_type = #tpu.core_type<tc>, window_params = [{transform_indices = @transform_0, window_bounds = array<i64: 8, 8, 32>}, {pipeline_mode = #tpu.pipeline_mode<synchronous>, transform_indices = @transform_1, window_bounds = array<i64: 32, 128>}, {pipeline_mode = #tpu.pipeline_mode<synchronous>, transform_indices = @transform_2, window_bounds = array<i64: 32, 128>}, {pipeline_mode = #tpu.pipeline_mode<synchronous>, transform_indices = @transform_3, window_bounds = array<i64: 1, 128>}, {pipeline_mode = #tpu.pipeline_mode<synchronous>, transform_indices = @transform_4, window_bounds = array<i64: 32, 32>}, {pipeline_mode = #tpu.pipeline_mode<synchronous>, transform_indices = @transform_5, window_bounds = array<i64: 1, 32>}, {pipeline_mode = #tpu.pipeline_mode<synchronous>, transform_indices = @transform_6, window_bounds = array<i64: 32, 128>}, {pipeline_mode = #tpu.pipeline_mode<synchronous>, transform_indices = @transform_7, window_bounds = array<i64: 1, 128>}, {transform_indices = @transform_8, window_bounds = array<i64: 8, 128>}]} {
    %c0 = arith.constant 0 : index
    %c0_0 = arith.constant 0 : index
    %0 = vector.load %arg2[%c0, %c0_0] : memref<32x128xbf16, #tpu.memory_space<vmem>>, vector<32x128xbf16>
    %c0_1 = arith.constant 0 : index
    %c0_2 = arith.constant 0 : index
    %1 = vector.load %arg3[%c0_1, %c0_2] : memref<32x128xbf16, #tpu.memory_space<vmem>>, vector<32x128xbf16>
    %c0_3 = arith.constant 0 : index
    %c0_4 = arith.constant 0 : index
    %c0_5 = arith.constant 0 : index
    %2 = vector.load %arg1[%c0_3, %c0_4, %c0_5] : memref<8x8x32xbf16, #tpu.memory_space<vmem>>, vector<8x8x32xbf16>
    %3 = vector.shape_cast %2 : vector<8x8x32xbf16> to vector<64x32xbf16>
    %cst = arith.constant dense<0.000000e+00> : vector<64x128xf32>
    %4 = tpu.matmul %3, %0, %cst {dimension_numbers = #tpu.dot_dimension_numbers<[1], [0], [0], [1], [0, 0, 1, 1], [], []>} : vector<64x32xbf16>, vector<32x128xbf16>, vector<64x128xf32> -> vector<64x128xf32>
    %c0_6 = arith.constant 0 : index
    %c0_7 = arith.constant 0 : index
    %5 = vector.load %arg4[%c0_6, %c0_7] : memref<1x128xf32, #tpu.memory_space<vmem>>, vector<1x128xf32>
    %6 = vector.broadcast %5 : vector<1x128xf32> to vector<64x128xf32>
    %7 = arith.addf %4, %6 : vector<64x128xf32>
    %8 = vector.shape_cast %7 : vector<64x128xf32> to vector<8x8x128xf32>
    %cst_8 = arith.constant 0.000000e+00 : f32
    %9 = vector.broadcast %cst_8 : f32 to vector<8x32xf32>
    %cst_9 = arith.constant 0.000000e+00 : f32
    %10 = vector.broadcast %cst_9 : f32 to vector<8x32xf32>
    %11 = vector.extract_strided_slice %8 {offsets = [0, 0, 0], sizes = [1, 8, 128], strides = [1, 1, 1]} : vector<8x8x128xf32> to vector<1x8x128xf32>
    %12 = vector.shape_cast %11 : vector<1x8x128xf32> to vector<8x128xf32>
    %13 = arith.truncf %9 : vector<8x32xf32> to vector<8x32xbf16>
    %cst_10 = arith.constant dense<0.000000e+00> : vector<8x128xf32>
    %14 = tpu.matmul %13, %1, %cst_10 {dimension_numbers = #tpu.dot_dimension_numbers<[1], [0], [0], [1], [0, 0, 1, 1], [], []>} : vector<8x32xbf16>, vector<32x128xbf16>, vector<8x128xf32> -> vector<8x128xf32>
    %15 = arith.addf %12, %14 : vector<8x128xf32>
    %16 = math.tanh %15 : vector<8x128xf32>
    %17 = vector.extract_strided_slice %16 {offsets = [0, 0], sizes = [8, 32], strides = [1, 1]} : vector<8x128xf32> to vector<8x32xf32>
    %cst_11 = arith.constant 1.000000e+00 : f32
    %18 = vector.broadcast %cst_11 : f32 to vector<8x32xf32>
    %19 = arith.addf %17, %18 : vector<8x32xf32>
    %cst_12 = arith.constant 5.000000e-01 : f32
    %20 = vector.broadcast %cst_12 : f32 to vector<8x32xf32>
    %21 = arith.mulf %20, %19 : vector<8x32xf32>
    %22 = vector.extract_strided_slice %16 {offsets = [0, 32], sizes = [8, 32], strides = [1, 1]} : vector<8x128xf32> to vector<8x32xf32>
    %cst_13 = arith.constant 1.000000e+00 : f32
    %23 = vector.broadcast %cst_13 : f32 to vector<8x32xf32>
    %24 = arith.addf %22, %23 : vector<8x32xf32>
    %cst_14 = arith.constant 5.000000e-01 : f32
    %25 = vector.broadcast %cst_14 : f32 to vector<8x32xf32>
    %26 = arith.mulf %25, %24 : vector<8x32xf32>
    %27 = vector.extract_strided_slice %16 {offsets = [0, 64], sizes = [8, 32], strides = [1, 1]} : vector<8x128xf32> to vector<8x32xf32>
    %28 = vector.extract_strided_slice %16 {offsets = [0, 96], sizes = [8, 32], strides = [1, 1]} : vector<8x128xf32> to vector<8x32xf32>
    %cst_15 = arith.constant 1.000000e+00 : f32
    %29 = vector.broadcast %cst_15 : f32 to vector<8x32xf32>
    %30 = arith.addf %28, %29 : vector<8x32xf32>
    %cst_16 = arith.constant 5.000000e-01 : f32
    %31 = vector.broadcast %cst_16 : f32 to vector<8x32xf32>
    %32 = arith.mulf %31, %30 : vector<8x32xf32>
    %33 = arith.mulf %26, %10 : vector<8x32xf32>
    %34 = arith.mulf %21, %27 : vector<8x32xf32>
    %35 = arith.addf %33, %34 : vector<8x32xf32>
    %36 = math.tanh %35 : vector<8x32xf32>
    %37 = arith.mulf %32, %36 : vector<8x32xf32>
    %38 = vector.extract_strided_slice %8 {offsets = [1, 0, 0], sizes = [1, 8, 128], strides = [1, 1, 1]} : vector<8x8x128xf32> to vector<1x8x128xf32>
    %39 = vector.shape_cast %38 : vector<1x8x128xf32> to vector<8x128xf32>
    %40 = arith.truncf %37 : vector<8x32xf32> to vector<8x32xbf16>
    %cst_17 = arith.constant dense<0.000000e+00> : vector<8x128xf32>
    %41 = tpu.matmul %40, %1, %cst_17 {dimension_numbers = #tpu.dot_dimension_numbers<[1], [0], [0], [1], [0, 0, 1, 1], [], []>} : vector<8x32xbf16>, vector<32x128xbf16>, vector<8x128xf32> -> vector<8x128xf32>
    %42 = arith.addf %39, %41 : vector<8x128xf32>
    %43 = math.tanh %42 : vector<8x128xf32>
    %44 = vector.extract_strided_slice %43 {offsets = [0, 0], sizes = [8, 32], strides = [1, 1]} : vector<8x128xf32> to vector<8x32xf32>
    %cst_18 = arith.constant 1.000000e+00 : f32
    %45 = vector.broadcast %cst_18 : f32 to vector<8x32xf32>
    %46 = arith.addf %44, %45 : vector<8x32xf32>
    %cst_19 = arith.constant 5.000000e-01 : f32
    %47 = vector.broadcast %cst_19 : f32 to vector<8x32xf32>
    %48 = arith.mulf %47, %46 : vector<8x32xf32>
    %49 = vector.extract_strided_slice %43 {offsets = [0, 32], sizes = [8, 32], strides = [1, 1]} : vector<8x128xf32> to vector<8x32xf32>
    %cst_20 = arith.constant 1.000000e+00 : f32
    %50 = vector.broadcast %cst_20 : f32 to vector<8x32xf32>
    %51 = arith.addf %49, %50 : vector<8x32xf32>
    %cst_21 = arith.constant 5.000000e-01 : f32
    %52 = vector.broadcast %cst_21 : f32 to vector<8x32xf32>
    %53 = arith.mulf %52, %51 : vector<8x32xf32>
    %54 = vector.extract_strided_slice %43 {offsets = [0, 64], sizes = [8, 32], strides = [1, 1]} : vector<8x128xf32> to vector<8x32xf32>
    %55 = vector.extract_strided_slice %43 {offsets = [0, 96], sizes = [8, 32], strides = [1, 1]} : vector<8x128xf32> to vector<8x32xf32>
    %cst_22 = arith.constant 1.000000e+00 : f32
    %56 = vector.broadcast %cst_22 : f32 to vector<8x32xf32>
    %57 = arith.addf %55, %56 : vector<8x32xf32>
    %cst_23 = arith.constant 5.000000e-01 : f32
    %58 = vector.broadcast %cst_23 : f32 to vector<8x32xf32>
    %59 = arith.mulf %58, %57 : vector<8x32xf32>
    %60 = arith.mulf %53, %35 : vector<8x32xf32>
    %61 = arith.mulf %48, %54 : vector<8x32xf32>
    %62 = arith.addf %60, %61 : vector<8x32xf32>
    %63 = math.tanh %62 : vector<8x32xf32>
    %64 = arith.mulf %59, %63 : vector<8x32xf32>
    %65 = vector.extract_strided_slice %8 {offsets = [2, 0, 0], sizes = [1, 8, 128], strides = [1, 1, 1]} : vector<8x8x128xf32> to vector<1x8x128xf32>
    %66 = vector.shape_cast %65 : vector<1x8x128xf32> to vector<8x128xf32>
    %67 = arith.truncf %64 : vector<8x32xf32> to vector<8x32xbf16>
    %cst_24 = arith.constant dense<0.000000e+00> : vector<8x128xf32>
    %68 = tpu.matmul %67, %1, %cst_24 {dimension_numbers = #tpu.dot_dimension_numbers<[1], [0], [0], [1], [0, 0, 1, 1], [], []>} : vector<8x32xbf16>, vector<32x128xbf16>, vector<8x128xf32> -> vector<8x128xf32>
    %69 = arith.addf %66, %68 : vector<8x128xf32>
    %70 = math.tanh %69 : vector<8x128xf32>
    %71 = vector.extract_strided_slice %70 {offsets = [0, 0], sizes = [8, 32], strides = [1, 1]} : vector<8x128xf32> to vector<8x32xf32>
    %cst_25 = arith.constant 1.000000e+00 : f32
    %72 = vector.broadcast %cst_25 : f32 to vector<8x32xf32>
    %73 = arith.addf %71, %72 : vector<8x32xf32>
    %cst_26 = arith.constant 5.000000e-01 : f32
    %74 = vector.broadcast %cst_26 : f32 to vector<8x32xf32>
    %75 = arith.mulf %74, %73 : vector<8x32xf32>
    %76 = vector.extract_strided_slice %70 {offsets = [0, 32], sizes = [8, 32], strides = [1, 1]} : vector<8x128xf32> to vector<8x32xf32>
    %cst_27 = arith.constant 1.000000e+00 : f32
    %77 = vector.broadcast %cst_27 : f32 to vector<8x32xf32>
    %78 = arith.addf %76, %77 : vector<8x32xf32>
    %cst_28 = arith.constant 5.000000e-01 : f32
    %79 = vector.broadcast %cst_28 : f32 to vector<8x32xf32>
    %80 = arith.mulf %79, %78 : vector<8x32xf32>
    %81 = vector.extract_strided_slice %70 {offsets = [0, 64], sizes = [8, 32], strides = [1, 1]} : vector<8x128xf32> to vector<8x32xf32>
    %82 = vector.extract_strided_slice %70 {offsets = [0, 96], sizes = [8, 32], strides = [1, 1]} : vector<8x128xf32> to vector<8x32xf32>
    %cst_29 = arith.constant 1.000000e+00 : f32
    %83 = vector.broadcast %cst_29 : f32 to vector<8x32xf32>
    %84 = arith.addf %82, %83 : vector<8x32xf32>
    %cst_30 = arith.constant 5.000000e-01 : f32
    %85 = vector.broadcast %cst_30 : f32 to vector<8x32xf32>
    %86 = arith.mulf %85, %84 : vector<8x32xf32>
    %87 = arith.mulf %80, %62 : vector<8x32xf32>
    %88 = arith.mulf %75, %81 : vector<8x32xf32>
    %89 = arith.addf %87, %88 : vector<8x32xf32>
    %90 = math.tanh %89 : vector<8x32xf32>
    %91 = arith.mulf %86, %90 : vector<8x32xf32>
    %92 = vector.extract_strided_slice %8 {offsets = [3, 0, 0], sizes = [1, 8, 128], strides = [1, 1, 1]} : vector<8x8x128xf32> to vector<1x8x128xf32>
    %93 = vector.shape_cast %92 : vector<1x8x128xf32> to vector<8x128xf32>
    %94 = arith.truncf %91 : vector<8x32xf32> to vector<8x32xbf16>
    %cst_31 = arith.constant dense<0.000000e+00> : vector<8x128xf32>
    %95 = tpu.matmul %94, %1, %cst_31 {dimension_numbers = #tpu.dot_dimension_numbers<[1], [0], [0], [1], [0, 0, 1, 1], [], []>} : vector<8x32xbf16>, vector<32x128xbf16>, vector<8x128xf32> -> vector<8x128xf32>
    %96 = arith.addf %93, %95 : vector<8x128xf32>
    %97 = math.tanh %96 : vector<8x128xf32>
    %98 = vector.extract_strided_slice %97 {offsets = [0, 0], sizes = [8, 32], strides = [1, 1]} : vector<8x128xf32> to vector<8x32xf32>
    %cst_32 = arith.constant 1.000000e+00 : f32
    %99 = vector.broadcast %cst_32 : f32 to vector<8x32xf32>
    %100 = arith.addf %98, %99 : vector<8x32xf32>
    %cst_33 = arith.constant 5.000000e-01 : f32
    %101 = vector.broadcast %cst_33 : f32 to vector<8x32xf32>
    %102 = arith.mulf %101, %100 : vector<8x32xf32>
    %103 = vector.extract_strided_slice %97 {offsets = [0, 32], sizes = [8, 32], strides = [1, 1]} : vector<8x128xf32> to vector<8x32xf32>
    %cst_34 = arith.constant 1.000000e+00 : f32
    %104 = vector.broadcast %cst_34 : f32 to vector<8x32xf32>
    %105 = arith.addf %103, %104 : vector<8x32xf32>
    %cst_35 = arith.constant 5.000000e-01 : f32
    %106 = vector.broadcast %cst_35 : f32 to vector<8x32xf32>
    %107 = arith.mulf %106, %105 : vector<8x32xf32>
    %108 = vector.extract_strided_slice %97 {offsets = [0, 64], sizes = [8, 32], strides = [1, 1]} : vector<8x128xf32> to vector<8x32xf32>
    %109 = vector.extract_strided_slice %97 {offsets = [0, 96], sizes = [8, 32], strides = [1, 1]} : vector<8x128xf32> to vector<8x32xf32>
    %cst_36 = arith.constant 1.000000e+00 : f32
    %110 = vector.broadcast %cst_36 : f32 to vector<8x32xf32>
    %111 = arith.addf %109, %110 : vector<8x32xf32>
    %cst_37 = arith.constant 5.000000e-01 : f32
    %112 = vector.broadcast %cst_37 : f32 to vector<8x32xf32>
    %113 = arith.mulf %112, %111 : vector<8x32xf32>
    %114 = arith.mulf %107, %89 : vector<8x32xf32>
    %115 = arith.mulf %102, %108 : vector<8x32xf32>
    %116 = arith.addf %114, %115 : vector<8x32xf32>
    %117 = math.tanh %116 : vector<8x32xf32>
    %118 = arith.mulf %113, %117 : vector<8x32xf32>
    %119 = vector.extract_strided_slice %8 {offsets = [4, 0, 0], sizes = [1, 8, 128], strides = [1, 1, 1]} : vector<8x8x128xf32> to vector<1x8x128xf32>
    %120 = vector.shape_cast %119 : vector<1x8x128xf32> to vector<8x128xf32>
    %121 = arith.truncf %118 : vector<8x32xf32> to vector<8x32xbf16>
    %cst_38 = arith.constant dense<0.000000e+00> : vector<8x128xf32>
    %122 = tpu.matmul %121, %1, %cst_38 {dimension_numbers = #tpu.dot_dimension_numbers<[1], [0], [0], [1], [0, 0, 1, 1], [], []>} : vector<8x32xbf16>, vector<32x128xbf16>, vector<8x128xf32> -> vector<8x128xf32>
    %123 = arith.addf %120, %122 : vector<8x128xf32>
    %124 = math.tanh %123 : vector<8x128xf32>
    %125 = vector.extract_strided_slice %124 {offsets = [0, 0], sizes = [8, 32], strides = [1, 1]} : vector<8x128xf32> to vector<8x32xf32>
    %cst_39 = arith.constant 1.000000e+00 : f32
    %126 = vector.broadcast %cst_39 : f32 to vector<8x32xf32>
    %127 = arith.addf %125, %126 : vector<8x32xf32>
    %cst_40 = arith.constant 5.000000e-01 : f32
    %128 = vector.broadcast %cst_40 : f32 to vector<8x32xf32>
    %129 = arith.mulf %128, %127 : vector<8x32xf32>
    %130 = vector.extract_strided_slice %124 {offsets = [0, 32], sizes = [8, 32], strides = [1, 1]} : vector<8x128xf32> to vector<8x32xf32>
    %cst_41 = arith.constant 1.000000e+00 : f32
    %131 = vector.broadcast %cst_41 : f32 to vector<8x32xf32>
    %132 = arith.addf %130, %131 : vector<8x32xf32>
    %cst_42 = arith.constant 5.000000e-01 : f32
    %133 = vector.broadcast %cst_42 : f32 to vector<8x32xf32>
    %134 = arith.mulf %133, %132 : vector<8x32xf32>
    %135 = vector.extract_strided_slice %124 {offsets = [0, 64], sizes = [8, 32], strides = [1, 1]} : vector<8x128xf32> to vector<8x32xf32>
    %136 = vector.extract_strided_slice %124 {offsets = [0, 96], sizes = [8, 32], strides = [1, 1]} : vector<8x128xf32> to vector<8x32xf32>
    %cst_43 = arith.constant 1.000000e+00 : f32
    %137 = vector.broadcast %cst_43 : f32 to vector<8x32xf32>
    %138 = arith.addf %136, %137 : vector<8x32xf32>
    %cst_44 = arith.constant 5.000000e-01 : f32
    %139 = vector.broadcast %cst_44 : f32 to vector<8x32xf32>
    %140 = arith.mulf %139, %138 : vector<8x32xf32>
    %141 = arith.mulf %134, %116 : vector<8x32xf32>
    %142 = arith.mulf %129, %135 : vector<8x32xf32>
    %143 = arith.addf %141, %142 : vector<8x32xf32>
    %144 = math.tanh %143 : vector<8x32xf32>
    %145 = arith.mulf %140, %144 : vector<8x32xf32>
    %146 = vector.extract_strided_slice %8 {offsets = [5, 0, 0], sizes = [1, 8, 128], strides = [1, 1, 1]} : vector<8x8x128xf32> to vector<1x8x128xf32>
    %147 = vector.shape_cast %146 : vector<1x8x128xf32> to vector<8x128xf32>
    %148 = arith.truncf %145 : vector<8x32xf32> to vector<8x32xbf16>
    %cst_45 = arith.constant dense<0.000000e+00> : vector<8x128xf32>
    %149 = tpu.matmul %148, %1, %cst_45 {dimension_numbers = #tpu.dot_dimension_numbers<[1], [0], [0], [1], [0, 0, 1, 1], [], []>} : vector<8x32xbf16>, vector<32x128xbf16>, vector<8x128xf32> -> vector<8x128xf32>
    %150 = arith.addf %147, %149 : vector<8x128xf32>
    %151 = math.tanh %150 : vector<8x128xf32>
    %152 = vector.extract_strided_slice %151 {offsets = [0, 0], sizes = [8, 32], strides = [1, 1]} : vector<8x128xf32> to vector<8x32xf32>
    %cst_46 = arith.constant 1.000000e+00 : f32
    %153 = vector.broadcast %cst_46 : f32 to vector<8x32xf32>
    %154 = arith.addf %152, %153 : vector<8x32xf32>
    %cst_47 = arith.constant 5.000000e-01 : f32
    %155 = vector.broadcast %cst_47 : f32 to vector<8x32xf32>
    %156 = arith.mulf %155, %154 : vector<8x32xf32>
    %157 = vector.extract_strided_slice %151 {offsets = [0, 32], sizes = [8, 32], strides = [1, 1]} : vector<8x128xf32> to vector<8x32xf32>
    %cst_48 = arith.constant 1.000000e+00 : f32
    %158 = vector.broadcast %cst_48 : f32 to vector<8x32xf32>
    %159 = arith.addf %157, %158 : vector<8x32xf32>
    %cst_49 = arith.constant 5.000000e-01 : f32
    %160 = vector.broadcast %cst_49 : f32 to vector<8x32xf32>
    %161 = arith.mulf %160, %159 : vector<8x32xf32>
    %162 = vector.extract_strided_slice %151 {offsets = [0, 64], sizes = [8, 32], strides = [1, 1]} : vector<8x128xf32> to vector<8x32xf32>
    %163 = vector.extract_strided_slice %151 {offsets = [0, 96], sizes = [8, 32], strides = [1, 1]} : vector<8x128xf32> to vector<8x32xf32>
    %cst_50 = arith.constant 1.000000e+00 : f32
    %164 = vector.broadcast %cst_50 : f32 to vector<8x32xf32>
    %165 = arith.addf %163, %164 : vector<8x32xf32>
    %cst_51 = arith.constant 5.000000e-01 : f32
    %166 = vector.broadcast %cst_51 : f32 to vector<8x32xf32>
    %167 = arith.mulf %166, %165 : vector<8x32xf32>
    %168 = arith.mulf %161, %143 : vector<8x32xf32>
    %169 = arith.mulf %156, %162 : vector<8x32xf32>
    %170 = arith.addf %168, %169 : vector<8x32xf32>
    %171 = math.tanh %170 : vector<8x32xf32>
    %172 = arith.mulf %167, %171 : vector<8x32xf32>
    %173 = vector.extract_strided_slice %8 {offsets = [6, 0, 0], sizes = [1, 8, 128], strides = [1, 1, 1]} : vector<8x8x128xf32> to vector<1x8x128xf32>
    %174 = vector.shape_cast %173 : vector<1x8x128xf32> to vector<8x128xf32>
    %175 = arith.truncf %172 : vector<8x32xf32> to vector<8x32xbf16>
    %cst_52 = arith.constant dense<0.000000e+00> : vector<8x128xf32>
    %176 = tpu.matmul %175, %1, %cst_52 {dimension_numbers = #tpu.dot_dimension_numbers<[1], [0], [0], [1], [0, 0, 1, 1], [], []>} : vector<8x32xbf16>, vector<32x128xbf16>, vector<8x128xf32> -> vector<8x128xf32>
    %177 = arith.addf %174, %176 : vector<8x128xf32>
    %178 = math.tanh %177 : vector<8x128xf32>
    %179 = vector.extract_strided_slice %178 {offsets = [0, 0], sizes = [8, 32], strides = [1, 1]} : vector<8x128xf32> to vector<8x32xf32>
    %cst_53 = arith.constant 1.000000e+00 : f32
    %180 = vector.broadcast %cst_53 : f32 to vector<8x32xf32>
    %181 = arith.addf %179, %180 : vector<8x32xf32>
    %cst_54 = arith.constant 5.000000e-01 : f32
    %182 = vector.broadcast %cst_54 : f32 to vector<8x32xf32>
    %183 = arith.mulf %182, %181 : vector<8x32xf32>
    %184 = vector.extract_strided_slice %178 {offsets = [0, 32], sizes = [8, 32], strides = [1, 1]} : vector<8x128xf32> to vector<8x32xf32>
    %cst_55 = arith.constant 1.000000e+00 : f32
    %185 = vector.broadcast %cst_55 : f32 to vector<8x32xf32>
    %186 = arith.addf %184, %185 : vector<8x32xf32>
    %cst_56 = arith.constant 5.000000e-01 : f32
    %187 = vector.broadcast %cst_56 : f32 to vector<8x32xf32>
    %188 = arith.mulf %187, %186 : vector<8x32xf32>
    %189 = vector.extract_strided_slice %178 {offsets = [0, 64], sizes = [8, 32], strides = [1, 1]} : vector<8x128xf32> to vector<8x32xf32>
    %190 = vector.extract_strided_slice %178 {offsets = [0, 96], sizes = [8, 32], strides = [1, 1]} : vector<8x128xf32> to vector<8x32xf32>
    %cst_57 = arith.constant 1.000000e+00 : f32
    %191 = vector.broadcast %cst_57 : f32 to vector<8x32xf32>
    %192 = arith.addf %190, %191 : vector<8x32xf32>
    %cst_58 = arith.constant 5.000000e-01 : f32
    %193 = vector.broadcast %cst_58 : f32 to vector<8x32xf32>
    %194 = arith.mulf %193, %192 : vector<8x32xf32>
    %195 = arith.mulf %188, %170 : vector<8x32xf32>
    %196 = arith.mulf %183, %189 : vector<8x32xf32>
    %197 = arith.addf %195, %196 : vector<8x32xf32>
    %198 = math.tanh %197 : vector<8x32xf32>
    %199 = arith.mulf %194, %198 : vector<8x32xf32>
    %200 = vector.extract_strided_slice %8 {offsets = [7, 0, 0], sizes = [1, 8, 128], strides = [1, 1, 1]} : vector<8x8x128xf32> to vector<1x8x128xf32>
    %201 = vector.shape_cast %200 : vector<1x8x128xf32> to vector<8x128xf32>
    %202 = arith.truncf %199 : vector<8x32xf32> to vector<8x32xbf16>
    %cst_59 = arith.constant dense<0.000000e+00> : vector<8x128xf32>
    %203 = tpu.matmul %202, %1, %cst_59 {dimension_numbers = #tpu.dot_dimension_numbers<[1], [0], [0], [1], [0, 0, 1, 1], [], []>} : vector<8x32xbf16>, vector<32x128xbf16>, vector<8x128xf32> -> vector<8x128xf32>
    %204 = arith.addf %201, %203 : vector<8x128xf32>
    %205 = math.tanh %204 : vector<8x128xf32>
    %206 = vector.extract_strided_slice %205 {offsets = [0, 0], sizes = [8, 32], strides = [1, 1]} : vector<8x128xf32> to vector<8x32xf32>
    %cst_60 = arith.constant 1.000000e+00 : f32
    %207 = vector.broadcast %cst_60 : f32 to vector<8x32xf32>
    %208 = arith.addf %206, %207 : vector<8x32xf32>
    %cst_61 = arith.constant 5.000000e-01 : f32
    %209 = vector.broadcast %cst_61 : f32 to vector<8x32xf32>
    %210 = arith.mulf %209, %208 : vector<8x32xf32>
    %211 = vector.extract_strided_slice %205 {offsets = [0, 32], sizes = [8, 32], strides = [1, 1]} : vector<8x128xf32> to vector<8x32xf32>
    %cst_62 = arith.constant 1.000000e+00 : f32
    %212 = vector.broadcast %cst_62 : f32 to vector<8x32xf32>
    %213 = arith.addf %211, %212 : vector<8x32xf32>
    %cst_63 = arith.constant 5.000000e-01 : f32
    %214 = vector.broadcast %cst_63 : f32 to vector<8x32xf32>
    %215 = arith.mulf %214, %213 : vector<8x32xf32>
    %216 = vector.extract_strided_slice %205 {offsets = [0, 64], sizes = [8, 32], strides = [1, 1]} : vector<8x128xf32> to vector<8x32xf32>
    %217 = vector.extract_strided_slice %205 {offsets = [0, 96], sizes = [8, 32], strides = [1, 1]} : vector<8x128xf32> to vector<8x32xf32>
    %cst_64 = arith.constant 1.000000e+00 : f32
    %218 = vector.broadcast %cst_64 : f32 to vector<8x32xf32>
    %219 = arith.addf %217, %218 : vector<8x32xf32>
    %cst_65 = arith.constant 5.000000e-01 : f32
    %220 = vector.broadcast %cst_65 : f32 to vector<8x32xf32>
    %221 = arith.mulf %220, %219 : vector<8x32xf32>
    %222 = arith.mulf %215, %197 : vector<8x32xf32>
    %223 = arith.mulf %210, %216 : vector<8x32xf32>
    %224 = arith.addf %222, %223 : vector<8x32xf32>
    %225 = math.tanh %224 : vector<8x32xf32>
    %226 = arith.mulf %221, %225 : vector<8x32xf32>
    %227 = arith.truncf %226 : vector<8x32xf32> to vector<8x32xbf16>
    %c0_66 = arith.constant 0 : index
    %c0_67 = arith.constant 0 : index
    %228 = vector.load %arg5[%c0_66, %c0_67] : memref<32x32xbf16, #tpu.memory_space<vmem>>, vector<32x32xbf16>
    %cst_68 = arith.constant dense<0.000000e+00> : vector<8x32xf32>
    %229 = tpu.matmul %227, %228, %cst_68 {dimension_numbers = #tpu.dot_dimension_numbers<[1], [0], [0], [1], [0, 0, 1, 1], [], []>} : vector<8x32xbf16>, vector<32x32xbf16>, vector<8x32xf32> -> vector<8x32xf32>
    %c0_69 = arith.constant 0 : index
    %c0_70 = arith.constant 0 : index
    %230 = vector.load %arg6[%c0_69, %c0_70] : memref<1x32xf32, #tpu.memory_space<vmem>>, vector<1x32xf32>
    %231 = vector.broadcast %230 : vector<1x32xf32> to vector<8x32xf32>
    %232 = arith.addf %229, %231 : vector<8x32xf32>
    %cst_71 = arith.constant 0.000000e+00 : f32
    %233 = vector.broadcast %cst_71 : f32 to vector<8x32xf32>
    %234 = arith.maximumf %232, %233 : vector<8x32xf32>
    %235 = arith.truncf %234 : vector<8x32xf32> to vector<8x32xbf16>
    %c0_72 = arith.constant 0 : index
    %c0_73 = arith.constant 0 : index
    %236 = vector.load %arg7[%c0_72, %c0_73] : memref<32x128xbf16, #tpu.memory_space<vmem>>, vector<32x128xbf16>
    %cst_74 = arith.constant dense<0.000000e+00> : vector<8x128xf32>
    %237 = tpu.matmul %235, %236, %cst_74 {dimension_numbers = #tpu.dot_dimension_numbers<[1], [0], [0], [1], [0, 0, 1, 1], [], []>} : vector<8x32xbf16>, vector<32x128xbf16>, vector<8x128xf32> -> vector<8x128xf32>
    %c0_75 = arith.constant 0 : index
    %c0_76 = arith.constant 0 : index
    %238 = vector.load %arg8[%c0_75, %c0_76] : memref<1x128xf32, #tpu.memory_space<vmem>>, vector<1x128xf32>
    %239 = vector.broadcast %238 : vector<1x128xf32> to vector<8x128xf32>
    %240 = arith.addf %237, %239 : vector<8x128xf32>
    %cst_77 = arith.constant dense<0xFF800000> : vector<8xf32>
    %241 = vector.multi_reduction <maximumf>, %240, %cst_77 [1] : vector<8x128xf32> to vector<8xf32>
    %242 = vector.shape_cast %241 : vector<8xf32> to vector<8x1xf32>
    %243 = vector.broadcast %242 : vector<8x1xf32> to vector<8x128xf32>
    %244 = arith.subf %240, %243 : vector<8x128xf32>
    %245 = math.exp %244 : vector<8x128xf32>
    %cst_78 = arith.constant dense<0.000000e+00> : vector<8xf32>
    %246 = vector.multi_reduction <add>, %245, %cst_78 [1] : vector<8x128xf32> to vector<8xf32>
    %247 = vector.shape_cast %246 : vector<8xf32> to vector<8x1xf32>
    %248 = math.log %247 : vector<8x1xf32>
    %249 = vector.broadcast %248 : vector<8x1xf32> to vector<8x128xf32>
    %250 = arith.subf %244, %249 : vector<8x128xf32>
    %c0_79 = arith.constant 0 : index
    %c0_80 = arith.constant 0 : index
    %251 = vector.load %arg9[%c0_79, %c0_80] : memref<8x128xf32, #tpu.memory_space<vmem>>, vector<8x128xf32>
    tpu.vector_store %arg9[%c0_79, %c0_80], %250 {strides = array<i32>} : memref<8x128xf32, #tpu.memory_space<vmem>>, vector<8x128xf32>,
    return
  }
  func.func @transform_0(%arg0: i32) -> (i32, i32, i32) {
    %c0_i32 = arith.constant 0 : i32
    %c0_i32_0 = arith.constant 0 : i32
    %c0_i32_1 = arith.constant 0 : i32
    return %c0_i32, %arg0, %c0_i32_0 : i32, i32, i32
  }
  func.func @transform_1(%arg0: i32) -> (i32, i32) {
    %c0_i32 = arith.constant 0 : i32
    %c0_i32_0 = arith.constant 0 : i32
    %c0_i32_1 = arith.constant 0 : i32
    return %c0_i32, %c0_i32_0 : i32, i32
  }
  func.func @transform_2(%arg0: i32) -> (i32, i32) {
    %c0_i32 = arith.constant 0 : i32
    %c0_i32_0 = arith.constant 0 : i32
    %c0_i32_1 = arith.constant 0 : i32
    return %c0_i32, %c0_i32_0 : i32, i32
  }
  func.func @transform_3(%arg0: i32) -> (i32, i32) {
    %c0_i32 = arith.constant 0 : i32
    %c0_i32_0 = arith.constant 0 : i32
    %c0_i32_1 = arith.constant 0 : i32
    return %c0_i32, %c0_i32_0 : i32, i32
  }
  func.func @transform_4(%arg0: i32) -> (i32, i32) {
    %c0_i32 = arith.constant 0 : i32
    %c0_i32_0 = arith.constant 0 : i32
    %c0_i32_1 = arith.constant 0 : i32
    return %c0_i32, %c0_i32_0 : i32, i32
  }
  func.func @transform_5(%arg0: i32) -> (i32, i32) {
    %c0_i32 = arith.constant 0 : i32
    %c0_i32_0 = arith.constant 0 : i32
    %c0_i32_1 = arith.constant 0 : i32
    return %c0_i32, %c0_i32_0 : i32, i32
  }
  func.func @transform_6(%arg0: i32) -> (i32, i32) {
    %c0_i32 = arith.constant 0 : i32
    %c0_i32_0 = arith.constant 0 : i32
    %c0_i32_1 = arith.constant 0 : i32
    return %c0_i32, %c0_i32_0 : i32, i32
  }
  func.func @transform_7(%arg0: i32) -> (i32, i32) {
    %c0_i32 = arith.constant 0 : i32
    %c0_i32_0 = arith.constant 0 : i32
    %c0_i32_1 = arith.constant 0 : i32
    return %c0_i32, %c0_i32_0 : i32, i32
  }
  func.func @transform_8(%arg0: i32) -> (i32, i32) {
    %c0_i32 = arith.constant 0 : i32
    %c0_i32_0 = arith.constant 0 : i32
    return %arg0, %c0_i32 : i32, i32
  }
}

</mosaic_0001>

<llo_original>
// kernel: tpu_custom_call.1
$region0: #{tpu_custom_call.1}
  #allocation0 [shape = 'u32[]', space=smem, size = 0x4, offset = 0x4, fixed_abs, tag = 'smem constant byte address 0x4 - core index']
  #allocation1 [shape = 'u32[144,128]{1,0:T(1,128)}', space=vmem, size = 0x12000, scoped, tag = 'internal scratch']
  %s0 = inlined_call_operand.hbm [shape: bf16[8,8,32], index: 0, kind: input, shape index: {}]
  %s1 = inlined_call_operand.hbm [shape: bf16[32,128], index: 1, kind: input, shape index: {}]
  %s2 = inlined_call_operand.hbm [shape: bf16[32,128], index: 2, kind: input, shape index: {}]
  %s3 = inlined_call_operand.vmem [shape: f32[1,128], index: 3, kind: input, shape index: {}]
  %s4 = inlined_call_operand.hbm [shape: bf16[32,32], index: 4, kind: input, shape index: {}]
  %s5 = inlined_call_operand.vmem [shape: f32[1,32], index: 5, kind: input, shape index: {}]
  %s6 = inlined_call_operand.vmem [shape: bf16[32,128], index: 6, kind: input, shape index: {}]
  %s7 = inlined_call_operand.vmem [shape: f32[1,128], index: 7, kind: input, shape index: {}]
  %s8 = inlined_call_operand.hbm [shape: f32[8,128], index: 8, kind: output, shape index: {}]
  %s9 = sld [smem:[#allocation0]]
  $region58: #{tpu_custom_call.1} parent=0
    _
  %s11 = ssub.s32 1, %s9
  %s12 = scalar_select 0, %s11, %s9
  $region1: #{tpu_custom_call.1} parent=0
    #allocation2 [shape = 'u8[16384]{0}', space=vmem, size = 0x4000, scoped, tag = 'input window, operand 0, single buffered']
    #allocation3 [shape = 's32[1]{0}', space=sflag, size = 0x4, scoped, tag = 'scoped memory for tpu_custom_call.1']
    #allocation4 [shape = 's32[1]{0}', space=sflag, size = 0x4, scoped, tag = 'scoped memory for tpu_custom_call.1']
    #allocation5 [shape = 'u8[8192]{0}', space=vmem, size = 0x2000, scoped, tag = 'input window, operand 1, single buffered']
    #allocation6 [shape = 's32[1]{0}', space=sflag, size = 0x4, scoped, tag = 'scoped memory for tpu_custom_call.1']
    #allocation7 [shape = 'u8[8192]{0}', space=vmem, size = 0x2000, scoped, tag = 'input window, operand 2, single buffered']
    #allocation8 [shape = 'u8[8192]{0}', space=vmem, size = 0x2000, scoped, tag = 'input window, operand 4, single buffered']
    #allocation9 [shape = 's32[1]{0}', space=sflag, size = 0x4, scoped, tag = 'scoped memory for tpu_custom_call.1']
    #allocation10 [shape = 'u8[4096]{0}', space=vmem, size = 0x1000, scoped, tag = 'output window, operand 0, single buffered']
    %13 = vsyncpa [#allocation3], 0
    %14 = vsyncpa [#allocation6], 0
    %15 = vsyncpa [#allocation9], 0
    %16 = vsyncpa [#allocation4], 0
    // Predicated region
    $region2: #{tpu_custom_call.1} parent=1 // pred_check
      _
    $region3: #{tpu_custom_call.1} parent=1 // pred_check_branch
      %18 = sbr.rel (0) target = $region5
    $region4: #{tpu_custom_call.1} parent=1 // pred_region
      %s20 = ssub.s32 512, 512
      %21 = vsyncadd [#allocation3], %s20
      %s22 = sshll.u32 [#allocation2], 4
      %s23 = int_to_ptr.vmem [resolvable:$true] %s22
      %28 = dma.hbm_to_vmem [thread:$0]  %s0, 512, %s23, [#allocation3], 64, 64, 4
    $region5: #{tpu_custom_call.1} parent=1 // pred_fallthru
      _
    // Predicated region
    $region6: #{tpu_custom_call.1} parent=1 // pred_check
      _
    $region7: #{tpu_custom_call.1} parent=1 // pred_check_branch
      %30 = sbr.rel (0) target = $region9
    $region8: #{tpu_custom_call.1} parent=1 // pred_region
      %s32 = ssub.s32 256, 256
      %33 = vsyncadd [#allocation6], %s32
      %s34 = sshll.u32 [#allocation5], 4
      %s35 = int_to_ptr.vmem [resolvable:$true] %s34
      %40 = dma.hbm_to_vmem [thread:$0]  %s1, 256, %s35, [#allocation6], 64, 64, 4
    $region9: #{tpu_custom_call.1} parent=1 // pred_fallthru
      _
    // Predicated region
    $region10: #{tpu_custom_call.1} parent=1 // pred_check
      _
    $region11: #{tpu_custom_call.1} parent=1 // pred_check_branch
      %42 = sbr.rel (0) target = $region13
    $region12: #{tpu_custom_call.1} parent=1 // pred_region
      %s44 = ssub.s32 256, 256
      %45 = vsyncadd [#allocation6], %s44
      %s46 = sshll.u32 [#allocation7], 4
      %s47 = int_to_ptr.vmem [resolvable:$true] %s46
      %52 = dma.hbm_to_vmem [thread:$0]  %s2, 256, %s47, [#allocation6], 64, 64, 4
    $region13: #{tpu_custom_call.1} parent=1 // pred_fallthru
      _
    // Predicated region
    $region14: #{tpu_custom_call.1} parent=1 // pred_check
      _
    $region15: #{tpu_custom_call.1} parent=1 // pred_check_branch
      %54 = sbr.rel (0) target = $region17
    $region16: #{tpu_custom_call.1} parent=1 // pred_region
      _
    $region17: #{tpu_custom_call.1} parent=1 // pred_fallthru
      _
    // Predicated region
    $region18: #{tpu_custom_call.1} parent=1 // pred_check
      _
    $region19: #{tpu_custom_call.1} parent=1 // pred_check_branch
      %56 = sbr.rel (0) target = $region21
    $region20: #{tpu_custom_call.1} parent=1 // pred_region
      %s58 = ssub.s32 256, 256
      %59 = vsyncadd [#allocation9], %s58
      %s60 = sshll.u32 [#allocation8], 4
      %s61 = int_to_ptr.vmem [resolvable:$true] %s60
      %66 = dma.hbm_to_vmem [thread:$0]  %s4, 256, %s61, [#allocation9], 64, 64, 4
    $region21: #{tpu_custom_call.1} parent=1 // pred_fallthru
      _
    // Predicated region
    $region22: #{tpu_custom_call.1} parent=1 // pred_check
      _
    $region23: #{tpu_custom_call.1} parent=1 // pred_check_branch
      %68 = sbr.rel (0) target = $region25
    $region24: #{tpu_custom_call.1} parent=1 // pred_region
      _
    $region25: #{tpu_custom_call.1} parent=1 // pred_fallthru
      _
    // Predicated region
    $region26: #{tpu_custom_call.1} parent=1 // pred_check
      _
    $region27: #{tpu_custom_call.1} parent=1 // pred_check_branch
      %70 = sbr.rel (0) target = $region29
    $region28: #{tpu_custom_call.1} parent=1 // pred_region
      _
    $region29: #{tpu_custom_call.1} parent=1 // pred_fallthru
      _
    // Predicated region
    $region30: #{tpu_custom_call.1} parent=1 // pred_check
      _
    $region31: #{tpu_custom_call.1} parent=1 // pred_check_branch
      %72 = sbr.rel (0) target = $region33
    $region32: #{tpu_custom_call.1} parent=1 // pred_region
      _
    $region33: #{tpu_custom_call.1} parent=1 // pred_fallthru
      _
    // Predicated region
    $region34: #{tpu_custom_call.1} parent=1 // pred_check
      _
    $region35: #{tpu_custom_call.1} parent=1 // pred_check_branch
      %74 = sbr.rel (0) target = $region37
    $region36: #{tpu_custom_call.1} parent=1 // pred_region
      %75 = dma.done [#allocation3], 512
    $region37: #{tpu_custom_call.1} parent=1 // pred_fallthru
      _
    // Predicated region
    $region38: #{tpu_custom_call.1} parent=1 // pred_check
      _
    $region39: #{tpu_custom_call.1} parent=1 // pred_check_branch
      %77 = sbr.rel (0) target = $region41
    $region40: #{tpu_custom_call.1} parent=1 // pred_region
      %78 = dma.done [#allocation6], 256
    $region41: #{tpu_custom_call.1} parent=1 // pred_fallthru
      _
    // Predicated region
    $region42: #{tpu_custom_call.1} parent=1 // pred_check
      _
    $region43: #{tpu_custom_call.1} parent=1 // pred_check_branch
      %80 = sbr.rel (0) target = $region45
    $region44: #{tpu_custom_call.1} parent=1 // pred_region
      %81 = dma.done [#allocation6], 256
    $region45: #{tpu_custom_call.1} parent=1 // pred_fallthru
      _
    // Predicated region
    $region46: #{tpu_custom_call.1} parent=1 // pred_check
      _
    $region47: #{tpu_custom_call.1} parent=1 // pred_check_branch
      %83 = sbr.rel (0) target = $region49
    $region48: #{tpu_custom_call.1} parent=1 // pred_region
      %84 = dma.done [#allocation9], 256
    $region49: #{tpu_custom_call.1} parent=1 // pred_fallthru
      _
    %v86 = vld [vmem:[#allocation5] sm:$0xf]
    %v87 = vld [vmem:[#allocation5 + $0x4] sm:$0xf]
    %v88 = vld [vmem:[#allocation5 + $0x8] sm:$0xf]
    %v89 = vld [vmem:[#allocation5 + $0xc] sm:$0xf]
    %v90 = vld [vmem:[#allocation7] sm:$0xf]
    %v91 = vld [vmem:[#allocation7 + $0x4] sm:$0xf]
    %v92 = vld [vmem:[#allocation7 + $0x8] sm:$0xf]
    %v93 = vld [vmem:[#allocation7 + $0xc] sm:$0xf]
    %v94 = vld [vmem:[#allocation2] sm:$0xf]
    %v95 = vld [vmem:[#allocation2 + $0x4] sm:$0xf]
    %v96 = vld [vmem:[#allocation2 + $0x8] sm:$0xf]
    %v97 = vld [vmem:[#allocation2 + $0xc] sm:$0xf]
    %v98 = vld [vmem:[#allocation2 + $0x10] sm:$0xf]
    %v99 = vld [vmem:[#allocation2 + $0x14] sm:$0xf]
    %v100 = vld [vmem:[#allocation2 + $0x18] sm:$0xf]
    %v101 = vld [vmem:[#allocation2 + $0x1c] sm:$0xf]
    %v102 = vld [vmem:[%s3] sm:$0x1]
    %v104 = vlaneseq
    %v105 = vshrl.u32 %v104, 7
    %v106 = vsub.s32 0, %v105
    %v107 = vrot.slane %v102, %v106
    %v117 = vunpack.c.l.b16 %v94
    %v118 = vunpack.c.l.b16 %v95
    %v119 = vunpack.c.l.b16 %v96
    %v120 = vunpack.c.l.b16 %v97
    %v121 = vunpack.c.l.b16 %v98
    %v122 = vunpack.c.l.b16 %v99
    %v123 = vunpack.c.l.b16 %v100
    %v124 = vunpack.c.l.b16 %v101
    %v125 = vpack.c.b16 %v118, %v117
    %v126 = vpack.c.b16 %v120, %v119
    %v127 = vpack.c.b16 %v122, %v121
    %v128 = vpack.c.b16 %v124, %v123
    %v133 = vunpack.c.l.b16 %v86
    %v134 = vunpack.c.l.b16 %v87
    %v135 = vunpack.c.l.b16 %v88
    %v136 = vunpack.c.l.b16 %v89
    %v137 = vpack.c.b16 %v134, %v133
    %v138 = vpack.c.b16 %v136, %v135
    %vm141 = vcmask 261120
    %v143 = vsel %vm141, %v125, 0
    %v146 = vsel %vm141, %v126, 0
    %v149 = vsel %vm141, %v127, 0
    %v152 = vsel %vm141, %v128, 0
    %154 = vmatprep.subr.bf16.mxu0 0
    %155 = vmatpush1.bf16.msra.mxu0 %v137
    %156 = vmatprep.subr.bf16.mxu0 0
    %157 = vmatpush1.bf16.msra.mxu0 %v138
    %158 = vmatprep.subr.bf16.mxu0 0
    %159 = vmatpush1.bf16.msra.mxu0 0
    %160 = vmatprep.subr.bf16.mxu0 0
    %161 = vmatpush1.bf16.msra.mxu0 0
    %162 = vmatprep.subr.bf16.mxu0 0
    %163 = vmatpush1.bf16.msra.mxu0 0
    %164 = vmatprep.subr.bf16.mxu0 0
    %165 = vmatpush1.bf16.msra.mxu0 0
    %166 = vmatprep.subr.bf16.mxu0 0
    %167 = vmatpush1.bf16.msra.mxu0 0
    %168 = vmatprep.subr.bf16.mxu0 0
    %169 = vmatpush1.bf16.msra.mxu0 0
    %170 = vmatprep.subr.bf16.mxu0 0
    %171 = vmatpush1.bf16.msra.mxu0 0
    %172 = vmatprep.subr.bf16.mxu0 0
    %173 = vmatpush1.bf16.msra.mxu0 0
    %174 = vmatprep.subr.bf16.mxu0 0
    %175 = vmatpush1.bf16.msra.mxu0 0
    %176 = vmatprep.subr.bf16.mxu0 0
    %177 = vmatpush1.bf16.msra.mxu0 0
    %178 = vmatprep.subr.bf16.mxu0 0
    %179 = vmatpush1.bf16.msra.mxu0 0
    %180 = vmatprep.subr.bf16.mxu0 0
    %181 = vmatpush1.bf16.msra.mxu0 0
    %182 = vmatprep.subr.bf16.mxu0 0
    %183 = vmatpush1.bf16.msra.mxu0 0
    %184 = vmatprep.subr.bf16.mxu0 0
    %185 = vmatpush1.bf16.msra.mxu0 0
    %186 = vmatprep.mubr.bf16.mxu0 0
    %187 = vmatmul.mubr.bf16.gmra.mrb[0].mxu0 %v143
    %v188 = vpop.f32.mrb[0].mxu0
    %v189 = vadd.f32 %v107, %v188
    %v190 = vpop.f32.mrb[0].mxu0
    %v191 = vpop.f32.mrb[0].mxu0
    %v192 = vadd.f32 %v107, %v191
    %v193 = vpop.f32.mrb[0].mxu0
    %194 = vmatprep.mubr.bf16.mxu0 0
    %195 = vmatmul.mubr.bf16.gmra.mrb[0].mxu0 %v146
    %v196 = vpop.f32.mrb[0].mxu0
    %v197 = vadd.f32 %v107, %v196
    %v198 = vpop.f32.mrb[0].mxu0
    %v199 = vpop.f32.mrb[0].mxu0
    %v200 = vadd.f32 %v107, %v199
    %v201 = vpop.f32.mrb[0].mxu0
    %202 = vmatprep.mubr.bf16.mxu0 0
    %203 = vmatmul.mubr.bf16.gmra.mrb[0].mxu0 %v149
    %v204 = vpop.f32.mrb[0].mxu0
    %v205 = vadd.f32 %v107, %v204
    %v206 = vpop.f32.mrb[0].mxu0
    %v207 = vpop.f32.mrb[0].mxu0
    %v208 = vadd.f32 %v107, %v207
    %v209 = vpop.f32.mrb[0].mxu0
    %210 = vmatprep.mubr.bf16.mxu0 0
    %211 = vmatmul.mubr.bf16.gmra.mrb[0].mxu0 %v152
    %v212 = vpop.f32.mrb[0].mxu0
    %v213 = vadd.f32 %v107, %v212
    %v214 = vpop.f32.mrb[0].mxu0
    %v215 = vpop.f32.mrb[0].mxu0
    %v216 = vadd.f32 %v107, %v215
    %v217 = vpop.f32.mrb[0].mxu0
    %218 = vdwg.mxu0
    %v223 = vunpack.c.l.b16 %v90
    %v224 = vunpack.c.l.b16 %v91
    %v225 = vunpack.c.l.b16 %v92
    %v226 = vunpack.c.l.b16 %v93
    %v227 = vpack.c.b16 %v224, %v223
    %v228 = vpack.c.b16 %v226, %v225
    %v232 = vsel %vm141, 0, 0
    %234 = vmatprep.subr.bf16.mxu0 0
    %235 = vmatpush1.bf16.msra.mxu0 %v227
    %236 = vmatprep.subr.bf16.mxu0 0
    %237 = vmatpush1.bf16.msra.mxu0 %v228
    %238 = vmatprep.subr.bf16.mxu0 0
    %239 = vmatpush1.bf16.msra.mxu0 0
    %240 = vmatprep.subr.bf16.mxu0 0
    %241 = vmatpush1.bf16.msra.mxu0 0
    %242 = vmatprep.subr.bf16.mxu0 0
    %243 = vmatpush1.bf16.msra.mxu0 0
    %244 = vmatprep.subr.bf16.mxu0 0
    %245 = vmatpush1.bf16.msra.mxu0 0
    %246 = vmatprep.subr.bf16.mxu0 0
    %247 = vmatpush1.bf16.msra.mxu0 0
    %248 = vmatprep.subr.bf16.mxu0 0
    %249 = vmatpush1.bf16.msra.mxu0 0
    %250 = vmatprep.subr.bf16.mxu0 0
    %251 = vmatpush1.bf16.msra.mxu0 0
    %252 = vmatprep.subr.bf16.mxu0 0
    %253 = vmatpush1.bf16.msra.mxu0 0
    %254 = vmatprep.subr.bf16.mxu0 0
    %255 = vmatpush1.bf16.msra.mxu0 0
    %256 = vmatprep.subr.bf16.mxu0 0
    %257 = vmatpush1.bf16.msra.mxu0 0
    %258 = vmatprep.subr.bf16.mxu0 0
    %259 = vmatpush1.bf16.msra.mxu0 0
    %260 = vmatprep.subr.bf16.mxu0 0
    %261 = vmatpush1.bf16.msra.mxu0 0
    %262 = vmatprep.subr.bf16.mxu0 0
    %263 = vmatpush1.bf16.msra.mxu0 0
    %264 = vmatprep.subr.bf16.mxu0 0
    %265 = vmatpush1.bf16.msra.mxu0 0
    %266 = vmatprep.mubr.bf16.mxu0 0
    %267 = vmatmul.mubr.bf16.gmra.mrb[0].mxu0 %v232
    %v268 = vpop.f32.mrb[0].mxu0
    %v269 = vadd.f32 0.0, %v268
    %v270 = vpop.f32.mrb[0].mxu0
    %v271 = vpop.f32.mrb[0].mxu0
    %v272 = vpop.f32.mrb[0].mxu0
    %273 = vdwg.mxu0
    %v274 = vadd.f32 %v189, %v269
    %v275 = vtanh.pop %v274
    %v276 = vadd.f32 %v275, 1.0
    %v277 = vmul.f32 %v276, 0.5
    %v278 = vmul.f32 %v277, 0.0
    %280 = vrot.lane.b32.xlu0 %v275, 64
    %v281 = vpop.permute.xlu0 %280
    %v283 = vmul.f32 %v277, %v281
    %285 = vrot.lane.b32.xlu0 %v283, 32
    %v286 = vpop.permute.xlu0 %285
    %v288 = vadd.f32 %v278, %v286
    %v289 = vtanh.pop %v288
    %291 = vrot.lane.b32.xlu0 %v289, 64
    %v292 = vpop.permute.xlu0 %291
    %v294 = vmul.f32 %v277, %v292
    %v295 = vpack.c.bf16 %v294, %v294
    %297 = vrot.lane.b32.xlu0 %v295, 32
    %v298 = vpop.permute.xlu0 %297
    %v300 = vsel %vm141, %v298, 0
    %302 = vmatprep.subr.bf16.mxu0 0
    %303 = vmatpush1.bf16.msra.mxu0 %v227
    %304 = vmatprep.subr.bf16.mxu0 0
    %305 = vmatpush1.bf16.msra.mxu0 %v228
    %306 = vmatprep.subr.bf16.mxu0 0
    %307 = vmatpush1.bf16.msra.mxu0 0
    %308 = vmatprep.subr.bf16.mxu0 0
    %309 = vmatpush1.bf16.msra.mxu0 0
    %310 = vmatprep.subr.bf16.mxu0 0
    %311 = vmatpush1.bf16.msra.mxu0 0
    %312 = vmatprep.subr.bf16.mxu0 0
    %313 = vmatpush1.bf16.msra.mxu0 0
    %314 = vmatprep.subr.bf16.mxu0 0
    %315 = vmatpush1.bf16.msra.mxu0 0
    %316 = vmatprep.subr.bf16.mxu0 0
    %317 = vmatpush1.bf16.msra.mxu0 0
    %318 = vmatprep.subr.bf16.mxu0 0
    %319 = vmatpush1.bf16.msra.mxu0 0
    %320 = vmatprep.subr.bf16.mxu0 0
    %321 = vmatpush1.bf16.msra.mxu0 0
    %322 = vmatprep.subr.bf16.mxu0 0
    %323 = vmatpush1.bf16.msra.mxu0 0
    %324 = vmatprep.subr.bf16.mxu0 0
    %325 = vmatpush1.bf16.msra.mxu0 0
    %326 = vmatprep.subr.bf16.mxu0 0
    %327 = vmatpush1.bf16.msra.mxu0 0
    %328 = vmatprep.subr.bf16.mxu0 0
    %329 = vmatpush1.bf16.msra.mxu0 0
    %330 = vmatprep.subr.bf16.mxu0 0
    %331 = vmatpush1.bf16.msra.mxu0 0
    %332 = vmatprep.subr.bf16.mxu0 0
    %333 = vmatpush1.bf16.msra.mxu0 0
    %334 = vmatprep.mubr.bf16.mxu0 0
    %335 = vmatmul.mubr.bf16.gmra.mrb[0].mxu0 %v300
    %v336 = vpop.f32.mrb[0].mxu0
    %v337 = vadd.f32 0.0, %v336
    %v338 = vpop.f32.mrb[0].mxu0
    %v339 = vpop.f32.mrb[0].mxu0
    %v340 = vpop.f32.mrb[0].mxu0
    %341 = vdwg.mxu0
    %v342 = vadd.f32 %v192, %v337
    %v343 = vtanh.pop %v342
    %v344 = vadd.f32 %v343, 1.0
    %v345 = vmul.f32 %v344, 0.5
    %v346 = vmul.f32 %v345, %v288
    %348 = vrot.lane.b32.xlu0 %v343, 64
    %v349 = vpop.permute.xlu0 %348
    %v351 = vmul.f32 %v345, %v349
    %353 = vrot.lane.b32.xlu0 %v351, 32
    %v354 = vpop.permute.xlu0 %353
    %v356 = vadd.f32 %v346, %v354
    %v357 = vtanh.pop %v356
    %359 = vrot.lane.b32.xlu0 %v357, 64
    %v360 = vpop.permute.xlu0 %359
    %v362 = vmul.f32 %v345, %v360
    %v363 = vpack.c.bf16 %v362, %v362
    %365 = vrot.lane.b32.xlu0 %v363, 32
    %v366 = vpop.permute.xlu0 %365
    %v368 = vsel %vm141, %v366, 0
    %370 = vmatprep.subr.bf16.mxu0 0
    %371 = vmatpush1.bf16.msra.mxu0 %v227
    %372 = vmatprep.subr.bf16.mxu0 0
    %373 = vmatpush1.bf16.msra.mxu0 %v228
    %374 = vmatprep.subr.bf16.mxu0 0
    %375 = vmatpush1.bf16.msra.mxu0 0
    %376 = vmatprep.subr.bf16.mxu0 0
    %377 = vmatpush1.bf16.msra.mxu0 0
    %378 = vmatprep.subr.bf16.mxu0 0
    %379 = vmatpush1.bf16.msra.mxu0 0
    %380 = vmatprep.subr.bf16.mxu0 0
    %381 = vmatpush1.bf16.msra.mxu0 0
    %382 = vmatprep.subr.bf16.mxu0 0
    %383 = vmatpush1.bf16.msra.mxu0 0
    %384 = vmatprep.subr.bf16.mxu0 0
    %385 = vmatpush1.bf16.msra.mxu0 0
    %386 = vmatprep.subr.bf16.mxu0 0
    %387 = vmatpush1.bf16.msra.mxu0 0
    %388 = vmatprep.subr.bf16.mxu0 0
    %389 = vmatpush1.bf16.msra.mxu0 0
    %390 = vmatprep.subr.bf16.mxu0 0
    %391 = vmatpush1.bf16.msra.mxu0 0
    %392 = vmatprep.subr.bf16.mxu0 0
    %393 = vmatpush1.bf16.msra.mxu0 0
    %394 = vmatprep.subr.bf16.mxu0 0
    %395 = vmatpush1.bf16.msra.mxu0 0
    %396 = vmatprep.subr.bf16.mxu0 0
    %397 = vmatpush1.bf16.msra.mxu0 0
    %398 = vmatprep.subr.bf16.mxu0 0
    %399 = vmatpush1.bf16.msra.mxu0 0
    %400 = vmatprep.subr.bf16.mxu0 0
    %401 = vmatpush1.bf16.msra.mxu0 0
    %402 = vmatprep.mubr.bf16.mxu0 0
    %403 = vmatmul.mubr.bf16.gmra.mrb[0].mxu0 %v368
    %v404 = vpop.f32.mrb[0].mxu0
    %v405 = vadd.f32 0.0, %v404
    %v406 = vpop.f32.mrb[0].mxu0
    %v407 = vpop.f32.mrb[0].mxu0
    %v408 = vpop.f32.mrb[0].mxu0
    %409 = vdwg.mxu0
    %v410 = vadd.f32 %v197, %v405
    %v411 = vtanh.pop %v410
    %v412 = vadd.f32 %v411, 1.0
    %v413 = vmul.f32 %v412, 0.5
    %v414 = vmul.f32 %v413, %v356
    %416 = vrot.lane.b32.xlu0 %v411, 64
    %v417 = vpop.permute.xlu0 %416
    %v419 = vmul.f32 %v413, %v417
    %421 = vrot.lane.b32.xlu0 %v419, 32
    %v422 = vpop.permute.xlu0 %421
    %v424 = vadd.f32 %v414, %v422
    %v425 = vtanh.pop %v424
    %427 = vrot.lane.b32.xlu0 %v425, 64
    %v428 = vpop.permute.xlu0 %427
    %v430 = vmul.f32 %v413, %v428
    %v431 = vpack.c.bf16 %v430, %v430
    %433 = vrot.lane.b32.xlu0 %v431, 32
    %v434 = vpop.permute.xlu0 %433
    %v436 = vsel %vm141, %v434, 0
    %438 = vmatprep.subr.bf16.mxu0 0
    %439 = vmatpush1.bf16.msra.mxu0 %v227
    %440 = vmatprep.subr.bf16.mxu0 0
    %441 = vmatpush1.bf16.msra.mxu0 %v228
    %442 = vmatprep.subr.bf16.mxu0 0
    %443 = vmatpush1.bf16.msra.mxu0 0
    %444 = vmatprep.subr.bf16.mxu0 0
    %445 = vmatpush1.bf16.msra.mxu0 0
    %446 = vmatprep.subr.bf16.mxu0 0
    %447 = vmatpush1.bf16.msra.mxu0 0
    %448 = vmatprep.subr.bf16.mxu0 0
    %449 = vmatpush1.bf16.msra.mxu0 0
    %450 = vmatprep.subr.bf16.mxu0 0
    %451 = vmatpush1.bf16.msra.mxu0 0
    %452 = vmatprep.subr.bf16.mxu0 0
    %453 = vmatpush1.bf16.msra.mxu0 0
    %454 = vmatprep.subr.bf16.mxu0 0
    %455 = vmatpush1.bf16.msra.mxu0 0
    %456 = vmatprep.subr.bf16.mxu0 0
    %457 = vmatpush1.bf16.msra.mxu0 0
    %458 = vmatprep.subr.bf16.mxu0 0
    %459 = vmatpush1.bf16.msra.mxu0 0
    %460 = vmatprep.subr.bf16.mxu0 0
    %461 = vmatpush1.bf16.msra.mxu0 0
    %462 = vmatprep.subr.bf16.mxu0 0
    %463 = vmatpush1.bf16.msra.mxu0 0
    %464 = vmatprep.subr.bf16.mxu0 0
    %465 = vmatpush1.bf16.msra.mxu0 0
    %466 = vmatprep.subr.bf16.mxu0 0
    %467 = vmatpush1.bf16.msra.mxu0 0
    %468 = vmatprep.subr.bf16.mxu0 0
    %469 = vmatpush1.bf16.msra.mxu0 0
    %470 = vmatprep.mubr.bf16.mxu0 0
    %471 = vmatmul.mubr.bf16.gmra.mrb[0].mxu0 %v436
    %v472 = vpop.f32.mrb[0].mxu0
    %v473 = vadd.f32 0.0, %v472
    %v474 = vpop.f32.mrb[0].mxu0
    %v475 = vpop.f32.mrb[0].mxu0
    %v476 = vpop.f32.mrb[0].mxu0
    %477 = vdwg.mxu0
    %v478 = vadd.f32 %v200, %v473
    %v479 = vtanh.pop %v478
    %v480 = vadd.f32 %v479, 1.0
    %v481 = vmul.f32 %v480, 0.5
    %v482 = vmul.f32 %v481, %v424
    %484 = vrot.lane.b32.xlu0 %v479, 64
    %v485 = vpop.permute.xlu0 %484
    %v487 = vmul.f32 %v481, %v485
    %489 = vrot.lane.b32.xlu0 %v487, 32
    %v490 = vpop.permute.xlu0 %489
    %v492 = vadd.f32 %v482, %v490
    %v493 = vtanh.pop %v492
    %495 = vrot.lane.b32.xlu0 %v493, 64
    %v496 = vpop.permute.xlu0 %495
    %v498 = vmul.f32 %v481, %v496
    %v499 = vpack.c.bf16 %v498, %v498
    %501 = vrot.lane.b32.xlu0 %v499, 32
    %v502 = vpop.permute.xlu0 %501
    %v504 = vsel %vm141, %v502, 0
    %506 = vmatprep.subr.bf16.mxu0 0
    %507 = vmatpush1.bf16.msra.mxu0 %v227
    %508 = vmatprep.subr.bf16.mxu0 0
    %509 = vmatpush1.bf16.msra.mxu0 %v228
    %510 = vmatprep.subr.bf16.mxu0 0
    %511 = vmatpush1.bf16.msra.mxu0 0
    %512 = vmatprep.subr.bf16.mxu0 0
    %513 = vmatpush1.bf16.msra.mxu0 0
    %514 = vmatprep.subr.bf16.mxu0 0
    %515 = vmatpush1.bf16.msra.mxu0 0
    %516 = vmatprep.subr.bf16.mxu0 0
    %517 = vmatpush1.bf16.msra.mxu0 0
    %518 = vmatprep.subr.bf16.mxu0 0
    %519 = vmatpush1.bf16.msra.mxu0 0
    %520 = vmatprep.subr.bf16.mxu0 0
    %521 = vmatpush1.bf16.msra.mxu0 0
    %522 = vmatprep.subr.bf16.mxu0 0
    %523 = vmatpush1.bf16.msra.mxu0 0
    %524 = vmatprep.subr.bf16.mxu0 0
    %525 = vmatpush1.bf16.msra.mxu0 0
    %526 = vmatprep.subr.bf16.mxu0 0
    %527 = vmatpush1.bf16.msra.mxu0 0
    %528 = vmatprep.subr.bf16.mxu0 0
    %529 = vmatpush1.bf16.msra.mxu0 0
    %530 = vmatprep.subr.bf16.mxu0 0
    %531 = vmatpush1.bf16.msra.mxu0 0
    %532 = vmatprep.subr.bf16.mxu0 0
    %533 = vmatpush1.bf16.msra.mxu0 0
    %534 = vmatprep.subr.bf16.mxu0 0
    %535 = vmatpush1.bf16.msra.mxu0 0
    %536 = vmatprep.subr.bf16.mxu0 0
    %537 = vmatpush1.bf16.msra.mxu0 0
    %538 = vmatprep.mubr.bf16.mxu0 0
    %539 = vmatmul.mubr.bf16.gmra.mrb[0].mxu0 %v504
    %v540 = vpop.f32.mrb[0].mxu0
    %v541 = vadd.f32 0.0, %v540
    %v542 = vpop.f32.mrb[0].mxu0
    %v543 = vpop.f32.mrb[0].mxu0
    %v544 = vpop.f32.mrb[0].mxu0
    %545 = vdwg.mxu0
    %v546 = vadd.f32 %v205, %v541
    %v547 = vtanh.pop %v546
    %v548 = vadd.f32 %v547, 1.0
    %v549 = vmul.f32 %v548, 0.5
    %v550 = vmul.f32 %v549, %v492
    %552 = vrot.lane.b32.xlu0 %v547, 64
    %v553 = vpop.permute.xlu0 %552
    %v555 = vmul.f32 %v549, %v553
    %557 = vrot.lane.b32.xlu0 %v555, 32
    %v558 = vpop.permute.xlu0 %557
    %v560 = vadd.f32 %v550, %v558
    %v561 = vtanh.pop %v560
    %563 = vrot.lane.b32.xlu0 %v561, 64
    %v564 = vpop.permute.xlu0 %563
    %v566 = vmul.f32 %v549, %v564
    %v567 = vpack.c.bf16 %v566, %v566
    %569 = vrot.lane.b32.xlu0 %v567, 32
    %v570 = vpop.permute.xlu0 %569
    %v572 = vsel %vm141, %v570, 0
    %574 = vmatprep.subr.bf16.mxu0 0
    %575 = vmatpush1.bf16.msra.mxu0 %v227
    %576 = vmatprep.subr.bf16.mxu0 0
    %577 = vmatpush1.bf16.msra.mxu0 %v228
    %578 = vmatprep.subr.bf16.mxu0 0
    %579 = vmatpush1.bf16.msra.mxu0 0
    %580 = vmatprep.subr.bf16.mxu0 0
    %581 = vmatpush1.bf16.msra.mxu0 0
    %582 = vmatprep.subr.bf16.mxu0 0
    %583 = vmatpush1.bf16.msra.mxu0 0
    %584 = vmatprep.subr.bf16.mxu0 0
    %585 = vmatpush1.bf16.msra.mxu0 0
    %586 = vmatprep.subr.bf16.mxu0 0
    %587 = vmatpush1.bf16.msra.mxu0 0
    %588 = vmatprep.subr.bf16.mxu0 0
    %589 = vmatpush1.bf16.msra.mxu0 0
    %590 = vmatprep.subr.bf16.mxu0 0
    %591 = vmatpush1.bf16.msra.mxu0 0
    %592 = vmatprep.subr.bf16.mxu0 0
    %593 = vmatpush1.bf16.msra.mxu0 0
    %594 = vmatprep.subr.bf16.mxu0 0
    %595 = vmatpush1.bf16.msra.mxu0 0
    %596 = vmatprep.subr.bf16.mxu0 0
    %597 = vmatpush1.bf16.msra.mxu0 0
    %598 = vmatprep.subr.bf16.mxu0 0
    %599 = vmatpush1.bf16.msra.mxu0 0
    %600 = vmatprep.subr.bf16.mxu0 0
    %601 = vmatpush1.bf16.msra.mxu0 0
    %602 = vmatprep.subr.bf16.mxu0 0
    %603 = vmatpush1.bf16.msra.mxu0 0
    %604 = vmatprep.subr.bf16.mxu0 0
    %605 = vmatpush1.bf16.msra.mxu0 0
    %606 = vmatprep.mubr.bf16.mxu0 0
    %607 = vmatmul.mubr.bf16.gmra.mrb[0].mxu0 %v572
    %v608 = vpop.f32.mrb[0].mxu0
    %v609 = vadd.f32 0.0, %v608
    %v610 = vpop.f32.mrb[0].mxu0
    %v611 = vpop.f32.mrb[0].mxu0
    %v612 = vpop.f32.mrb[0].mxu0
    %613 = vdwg.mxu0
    %v614 = vadd.f32 %v208, %v609
    %v615 = vtanh.pop %v614
    %v616 = vadd.f32 %v615, 1.0
    %v617 = vmul.f32 %v616, 0.5
    %v618 = vmul.f32 %v617, %v560
    %620 = vrot.lane.b32.xlu0 %v615, 64
    %v621 = vpop.permute.xlu0 %620
    %v623 = vmul.f32 %v617, %v621
    %625 = vrot.lane.b32.xlu0 %v623, 32
    %v626 = vpop.permute.xlu0 %625
    %v628 = vadd.f32 %v618, %v626
    %v629 = vtanh.pop %v628
    %631 = vrot.lane.b32.xlu0 %v629, 64
    %v632 = vpop.permute.xlu0 %631
    %v634 = vmul.f32 %v617, %v632
    %v635 = vpack.c.bf16 %v634, %v634
    %637 = vrot.lane.b32.xlu0 %v635, 32
    %v638 = vpop.permute.xlu0 %637
    %v640 = vsel %vm141, %v638, 0
    %642 = vmatprep.subr.bf16.mxu0 0
    %643 = vmatpush1.bf16.msra.mxu0 %v227
    %644 = vmatprep.subr.bf16.mxu0 0
    %645 = vmatpush1.bf16.msra.mxu0 %v228
    %646 = vmatprep.subr.bf16.mxu0 0
    %647 = vmatpush1.bf16.msra.mxu0 0
    %648 = vmatprep.subr.bf16.mxu0 0
    %649 = vmatpush1.bf16.msra.mxu0 0
    %650 = vmatprep.subr.bf16.mxu0 0
    %651 = vmatpush1.bf16.msra.mxu0 0
    %652 = vmatprep.subr.bf16.mxu0 0
    %653 = vmatpush1.bf16.msra.mxu0 0
    %654 = vmatprep.subr.bf16.mxu0 0
    %655 = vmatpush1.bf16.msra.mxu0 0
    %656 = vmatprep.subr.bf16.mxu0 0
    %657 = vmatpush1.bf16.msra.mxu0 0
    %658 = vmatprep.subr.bf16.mxu0 0
    %659 = vmatpush1.bf16.msra.mxu0 0
    %660 = vmatprep.subr.bf16.mxu0 0
    %661 = vmatpush1.bf16.msra.mxu0 0
    %662 = vmatprep.subr.bf16.mxu0 0
    %663 = vmatpush1.bf16.msra.mxu0 0
    %664 = vmatprep.subr.bf16.mxu0 0
    %665 = vmatpush1.bf16.msra.mxu0 0
    %666 = vmatprep.subr.bf16.mxu0 0
    %667 = vmatpush1.bf16.msra.mxu0 0
    %668 = vmatprep.subr.bf16.mxu0 0
    %669 = vmatpush1.bf16.msra.mxu0 0
    %670 = vmatprep.subr.bf16.mxu0 0
    %671 = vmatpush1.bf16.msra.mxu0 0
    %672 = vmatprep.subr.bf16.mxu0 0
    %673 = vmatpush1.bf16.msra.mxu0 0
    %674 = vmatprep.mubr.bf16.mxu0 0
    %675 = vmatmul.mubr.bf16.gmra.mrb[0].mxu0 %v640
    %v676 = vpop.f32.mrb[0].mxu0
    %v677 = vadd.f32 0.0, %v676
    %v678 = vpop.f32.mrb[0].mxu0
    %v679 = vpop.f32.mrb[0].mxu0
    %v680 = vpop.f32.mrb[0].mxu0
    %681 = vdwg.mxu0
    %v682 = vadd.f32 %v213, %v677
    %v683 = vtanh.pop %v682
    %v684 = vadd.f32 %v683, 1.0
    %v685 = vmul.f32 %v684, 0.5
    %v686 = vmul.f32 %v685, %v628
    %688 = vrot.lane.b32.xlu0 %v683, 64
    %v689 = vpop.permute.xlu0 %688
    %v691 = vmul.f32 %v685, %v689
    %693 = vrot.lane.b32.xlu0 %v691, 32
    %v694 = vpop.permute.xlu0 %693
    %v696 = vadd.f32 %v686, %v694
    %v697 = vtanh.pop %v696
    %699 = vrot.lane.b32.xlu0 %v697, 64
    %v700 = vpop.permute.xlu0 %699
    %v702 = vmul.f32 %v685, %v700
    %v703 = vpack.c.bf16 %v702, %v702
    %705 = vrot.lane.b32.xlu0 %v703, 32
    %v706 = vpop.permute.xlu0 %705
    %v708 = vsel %vm141, %v706, 0
    %710 = vmatprep.subr.bf16.mxu0 0
    %711 = vmatpush1.bf16.msra.mxu0 %v227
    %712 = vmatprep.subr.bf16.mxu0 0
    %713 = vmatpush1.bf16.msra.mxu0 %v228
    %714 = vmatprep.subr.bf16.mxu0 0
    %715 = vmatpush1.bf16.msra.mxu0 0
    %716 = vmatprep.subr.bf16.mxu0 0
    %717 = vmatpush1.bf16.msra.mxu0 0
    %718 = vmatprep.subr.bf16.mxu0 0
    %719 = vmatpush1.bf16.msra.mxu0 0
    %720 = vmatprep.subr.bf16.mxu0 0
    %721 = vmatpush1.bf16.msra.mxu0 0
    %722 = vmatprep.subr.bf16.mxu0 0
    %723 = vmatpush1.bf16.msra.mxu0 0
    %724 = vmatprep.subr.bf16.mxu0 0
    %725 = vmatpush1.bf16.msra.mxu0 0
    %726 = vmatprep.subr.bf16.mxu0 0
    %727 = vmatpush1.bf16.msra.mxu0 0
    %728 = vmatprep.subr.bf16.mxu0 0
    %729 = vmatpush1.bf16.msra.mxu0 0
    %730 = vmatprep.subr.bf16.mxu0 0
    %731 = vmatpush1.bf16.msra.mxu0 0
    %732 = vmatprep.subr.bf16.mxu0 0
    %733 = vmatpush1.bf16.msra.mxu0 0
    %734 = vmatprep.subr.bf16.mxu0 0
    %735 = vmatpush1.bf16.msra.mxu0 0
    %736 = vmatprep.subr.bf16.mxu0 0
    %737 = vmatpush1.bf16.msra.mxu0 0
    %738 = vmatprep.subr.bf16.mxu0 0
    %739 = vmatpush1.bf16.msra.mxu0 0
    %740 = vmatprep.subr.bf16.mxu0 0
    %741 = vmatpush1.bf16.msra.mxu0 0
    %742 = vmatprep.mubr.bf16.mxu0 0
    %743 = vmatmul.mubr.bf16.gmra.mrb[0].mxu0 %v708
    %v744 = vpop.f32.mrb[0].mxu0
    %v745 = vadd.f32 0.0, %v744
    %v746 = vpop.f32.mrb[0].mxu0
    %v747 = vpop.f32.mrb[0].mxu0
    %v748 = vpop.f32.mrb[0].mxu0
    %749 = vdwg.mxu0
    %v750 = vadd.f32 %v216, %v745
    %v751 = vtanh.pop %v750
    %v752 = vadd.f32 %v751, 1.0
    %v753 = vmul.f32 %v752, 0.5
    %v754 = vmul.f32 %v753, %v696
    %756 = vrot.lane.b32.xlu0 %v751, 64
    %v757 = vpop.permute.xlu0 %756
    %v759 = vmul.f32 %v753, %v757
    %761 = vrot.lane.b32.xlu0 %v759, 32
    %v762 = vpop.permute.xlu0 %761
    %v764 = vadd.f32 %v754, %v762
    %v765 = vtanh.pop %v764
    %767 = vrot.lane.b32.xlu0 %v765, 64
    %v768 = vpop.permute.xlu0 %767
    %v770 = vmul.f32 %v753, %v768
    %v771 = vpack.c.bf16 %v770, %v770
    %v772 = vld [vmem:[#allocation8] sm:$0xf]
    %v773 = vld [vmem:[#allocation8 + $0x4] sm:$0xf]
    %v774 = vld [vmem:[#allocation8 + $0x8] sm:$0xf]
    %v775 = vld [vmem:[#allocation8 + $0xc] sm:$0xf]
    %v776 = vld [vmem:[%s5] sm:$0x1]
    %v778 = vlaneseq
    %v779 = vshrl.u32 %v778, 7
    %v780 = vsub.s32 0, %v779
    %v781 = vrot.slane %v776, %v780
    %784 = vrot.lane.b32.xlu0 %v771, 32
    %v785 = vpop.permute.xlu0 %784
    %v790 = vunpack.c.l.b16 %v772
    %v791 = vunpack.c.l.b16 %v773
    %v792 = vunpack.c.l.b16 %v774
    %v793 = vunpack.c.l.b16 %v775
    %v794 = vpack.c.b16 %v791, %v790
    %v795 = vpack.c.b16 %v793, %v792
    %v799 = vsel %vm141, %v785, 0
    %801 = vmatprep.subr.bf16.mxu0 0
    %802 = vmatpush1.bf16.msra.mxu0 %v794
    %803 = vmatprep.subr.bf16.mxu0 0
    %804 = vmatpush1.bf16.msra.mxu0 %v795
    %805 = vmatprep.subr.bf16.mxu0 0
    %806 = vmatpush1.bf16.msra.mxu0 0
    %807 = vmatprep.subr.bf16.mxu0 0
    %808 = vmatpush1.bf16.msra.mxu0 0
    %809 = vmatprep.subr.bf16.mxu0 0
    %810 = vmatpush1.bf16.msra.mxu0 0
    %811 = vmatprep.subr.bf16.mxu0 0
    %812 = vmatpush1.bf16.msra.mxu0 0
    %813 = vmatprep.subr.bf16.mxu0 0
    %814 = vmatpush1.bf16.msra.mxu0 0
    %815 = vmatprep.subr.bf16.mxu0 0
    %816 = vmatpush1.bf16.msra.mxu0 0
    %817 = vmatprep.subr.bf16.mxu0 0
    %818 = vmatpush1.bf16.msra.mxu0 0
    %819 = vmatprep.subr.bf16.mxu0 0
    %820 = vmatpush1.bf16.msra.mxu0 0
    %821 = vmatprep.subr.bf16.mxu0 0
    %822 = vmatpush1.bf16.msra.mxu0 0
    %823 = vmatprep.subr.bf16.mxu0 0
    %824 = vmatpush1.bf16.msra.mxu0 0
    %825 = vmatprep.subr.bf16.mxu0 0
    %826 = vmatpush1.bf16.msra.mxu0 0
    %827 = vmatprep.subr.bf16.mxu0 0
    %828 = vmatpush1.bf16.msra.mxu0 0
    %829 = vmatprep.subr.bf16.mxu0 0
    %830 = vmatpush1.bf16.msra.mxu0 0
    %831 = vmatprep.subr.bf16.mxu0 0
    %832 = vmatpush1.bf16.msra.mxu0 0
    %833 = vmatprep.mubr.bf16.mxu0 0
    %834 = vmatmul.mubr.bf16.gmra.mrb[0].mxu0 %v799
    %v835 = vpop.f32.mrb[0].mxu0
    %v836 = vadd.f32 %v781, %v835
    %v837 = vpop.f32.mrb[0].mxu0
    %v838 = vpop.f32.mrb[0].mxu0
    %v839 = vpop.f32.mrb[0].mxu0
    %840 = vdwg.mxu0
    %v841 = vmax.f32 %v836, 0.0
    %v842 = vpack.c.bf16 %v841, %v841
    %v843 = vld [vmem:[%s6] sm:$0xf]
    %v844 = vld [vmem:[%s6 + $0x4] sm:$0xf]
    %v845 = vld [vmem:[%s6 + $0x8] sm:$0xf]
    %v846 = vld [vmem:[%s6 + $0xc] sm:$0xf]
    %v847 = vld [vmem:[%s7] sm:$0x1]
    %v849 = vlaneseq
    %v850 = vshrl.u32 %v849, 7
    %v851 = vsub.s32 0, %v850
    %v852 = vrot.slane %v847, %v851
    %v858 = vunpack.c.l.b16 %v843
    %v859 = vunpack.c.l.b16 %v844
    %v860 = vunpack.c.l.b16 %v845
    %v861 = vunpack.c.l.b16 %v846
    %v862 = vpack.c.b16 %v859, %v858
    %v863 = vpack.c.b16 %v861, %v860
    %v867 = vsel %vm141, %v842, 0
    %869 = vmatprep.subr.bf16.mxu0 0
    %870 = vmatpush1.bf16.msra.mxu0 %v862
    %871 = vmatprep.subr.bf16.mxu0 0
    %872 = vmatpush1.bf16.msra.mxu0 %v863
    %873 = vmatprep.subr.bf16.mxu0 0
    %874 = vmatpush1.bf16.msra.mxu0 0
    %875 = vmatprep.subr.bf16.mxu0 0
    %876 = vmatpush1.bf16.msra.mxu0 0
    %877 = vmatprep.subr.bf16.mxu0 0
    %878 = vmatpush1.bf16.msra.mxu0 0
    %879 = vmatprep.subr.bf16.mxu0 0
    %880 = vmatpush1.bf16.msra.mxu0 0
    %881 = vmatprep.subr.bf16.mxu0 0
    %882 = vmatpush1.bf16.msra.mxu0 0
    %883 = vmatprep.subr.bf16.mxu0 0
    %884 = vmatpush1.bf16.msra.mxu0 0
    %885 = vmatprep.subr.bf16.mxu0 0
    %886 = vmatpush1.bf16.msra.mxu0 0
    %887 = vmatprep.subr.bf16.mxu0 0
    %888 = vmatpush1.bf16.msra.mxu0 0
    %889 = vmatprep.subr.bf16.mxu0 0
    %890 = vmatpush1.bf16.msra.mxu0 0
    %891 = vmatprep.subr.bf16.mxu0 0
    %892 = vmatpush1.bf16.msra.mxu0 0
    %893 = vmatprep.subr.bf16.mxu0 0
    %894 = vmatpush1.bf16.msra.mxu0 0
    %895 = vmatprep.subr.bf16.mxu0 0
    %896 = vmatpush1.bf16.msra.mxu0 0
    %897 = vmatprep.subr.bf16.mxu0 0
    %898 = vmatpush1.bf16.msra.mxu0 0
    %899 = vmatprep.subr.bf16.mxu0 0
    %900 = vmatpush1.bf16.msra.mxu0 0
    %901 = vmatprep.mubr.bf16.mxu0 0
    %902 = vmatmul.mubr.bf16.gmra.mrb[0].mxu0 %v867
    %v903 = vpop.f32.mrb[0].mxu0
    %v904 = vadd.f32 %v852, %v903
    %v905 = vpop.f32.mrb[0].mxu0
    %v906 = vpop.f32.mrb[0].mxu0
    %v907 = vpop.f32.mrb[0].mxu0
    %908 = vdwg.mxu0
    %909 = vmax.xlane.f32.xlu0 %v904
    %v910 = vpop.xlane.xlu0 %909
    %v911 = vsub.f32 %v904, %v910
    %v912 = vmul.f32 %v911, 1.442695
    %v913 = vpow.pop %v912
    %914 = vadd.xlane.f32.xlu0 %v913
    %v915 = vpop.xlane.xlu0 %914
    %v916 = vlog2.pop %v915
    %v917 = vmul.f32 %v916, 0.6931472
    %v918 = vsub.f32 %v911, %v917
    %919 = vst [vmem:[#allocation10] sm:$0xff] %v918
    // Predicated region
    $region50: #{tpu_custom_call.1} parent=1 // pred_check
      _
    $region51: #{tpu_custom_call.1} parent=1 // pred_check_branch
      %921 = sbr.rel (0) target = $region53
    $region52: #{tpu_custom_call.1} parent=1 // pred_region
      %s923 = ssub.s32 128, 128
      %924 = vsyncadd [#allocation4], %s923
      %s926 = sshll.u32 [#allocation10], 4
      %s927 = int_to_ptr.vmem [resolvable:$true] %s926
      %929 = dma.vmem_to_hbm [thread:$0]  %s927, 128, %s8, [#allocation4]
    $region53: #{tpu_custom_call.1} parent=1 // pred_fallthru
      _
    // Predicated region
    $region54: #{tpu_custom_call.1} parent=1 // pred_check
      _
    $region55: #{tpu_custom_call.1} parent=1 // pred_check_branch
      %931 = sbr.rel (0) target = $region57
    $region56: #{tpu_custom_call.1} parent=1 // pred_region
      %932 = dma.done [#allocation4], 128
    $region57: #{tpu_custom_call.1} parent=1 // pred_fallthru
      _
    %933 = vsyncpa [#allocation3], 1
    %934 = vsyncpa [#allocation6], 1
    %935 = vsyncpa [#allocation9], 1
    %936 = vsyncpa [#allocation4], 1

</llo_original>
